<compile_context>
chip_gen: v5e
topology: v5e:2x2
jax: 0.10.0
libtpu: 0.0.40
codegen_flags: <defaults>
</compile_context>

<pallas_src>
import functools

import jax
import jax.numpy as jnp
from jax import lax
from jax.experimental import pallas as pl
from jax.experimental.pallas import tpu as pltpu

ALPHA = 0.25      # BinaryFocalLoss defaults
GAMMA = 2.0       # exploited as x*x (compile-time constant == 2)
EPS = 1e-7
DICE_EPS = 1e-8

# Per-batch partial-sum layout (each stat is an (8, 128) f32 slab):
#   0: sum(b)            1: sum(d*label)      2: sum(d*label1)
#   3: sum(p*label)@[0,0] 4: sum(p)@[0,0]     5: sum(label)@[0,0]
#   6: sum(p*label1)@[0,1] 7: sum(p)@[0,1]    8: sum(label1)@[0,1]
NUM_STATS = 9


def _multi_focal_kernel(pred_ref, lab_ref, lab1_ref, out_ref,
                        *, tile_rows, rows_valid, needs_mask):
    n = pl.program_id(0)
    s = pl.program_id(1)
    c = pl.program_id(2)

    # The output block is revisited across the (s, c) axes for a fixed n -> it acts as
    # the accumulator.  Initialize once per batch index.
    @pl.when(jnp.logical_and(s == 0, c == 0))
    def _():
        out_ref[...] = jnp.zeros_like(out_ref)

    # (tile_rows, 128) tiles; math in f32 regardless of the input dtype.
    p = pred_ref[...].astype(jnp.float32)
    lab = lab_ref[...].astype(jnp.float32)
    lab1 = lab1_ref[...].astype(jnp.float32)

    if needs_mask:
        # Ragged last tile: zero out-of-range rows (zeros are exact no-ops for this loss).
        ridx = lax.broadcasted_iota(jnp.int32, p.shape, 0)
        valid = (s * tile_rows + ridx) < rows_valid
        p = jnp.where(valid, p, 0.0)
        lab = jnp.where(valid, lab, 0.0)
        lab1 = jnp.where(valid, lab1, 0.0)

    one_m_p = 1.0 - p
    # a = per-element focal loss when y == 1, b = when y == 0 (both label-independent).
    a = (-ALPHA) * (one_m_p * one_m_p) * jnp.log(p + EPS)
    b = (-(1.0 - ALPHA)) * (p * p) * jnp.log(one_m_p + EPS)
    d = a - b  # focal(y) = b + d * y   (the "b +" is deferred to the wrapper epilogue)

    def vsum(x):
        # Collapse to a single (8, 128) vreg-shaped partial with pure sublane-aligned
        # VPU adds (no XLU cross-sublane reduce, no partial-sublane stores).
        return jnp.sum(x.reshape(-1, 8, 128), axis=0)

    # Focal partial sums.
    out_ref[0] += vsum(b)
    out_ref[1] += vsum(d * lab)
    out_ref[2] += vsum(d * lab1)

    # Dice partials folded into the streaming loop (pred[0,0] vs label[0,0]).
    @pl.when(jnp.logical_and(n == 0, c == 0))
    def _():
        out_ref[3] += vsum(p * lab)
        out_ref[4] += vsum(p)
        out_ref[5] += vsum(lab)

    # pred[0,1] vs label1[0,0].
    @pl.when(jnp.logical_and(n == 0, c == 1))
    def _():
        out_ref[6] += vsum(p * lab1)
        out_ref[7] += vsum(p)
        out_ref[8] += vsum(lab1)


def _sublane_multiple(*dtypes):
    """Layout-legal row multiple for the given input dtypes (f32->8, bf16->16, int8->32)."""
    m = 8
    for dt in dtypes:
        m = max(m, {4: 8, 2: 16, 1: 32}.get(jnp.dtype(dt).itemsize, 8))
    return m


def multi_focal_loss(pred, label, label1, *, tile_rows_cap=2048):
    """pred: [N, C, D, H, W] (C >= 2), label/label1: [N, 1, D, H, W]; returns (loss, fl0, fl1).

    Inputs may be f32 / bf16 / int8 — the kernel upcasts to f32 internally, so narrow
    producer dtypes directly cut HBM bytes on bandwidth-bound parts.
    """
    n, c, dd, hh, ww = pred.shape
    assert c >= 2, "MultiFocalLoss needs at least 2 channels (uses pred[0,0] and pred[0,1])"
    assert label.shape == (n, 1, dd, hh, ww) and label1.shape == (n, 1, dd, hh, ww)
    spatial = dd * hh * ww
    assert spatial % 128 == 0, "D*H*W must be divisible by 128 (lane width)"
    rows = spatial // 128

    mult = _sublane_multiple(pred.dtype, label.dtype, label1.dtype)
    rows_pad = ((rows + mult - 1) // mult) * mult
    cap = max(mult, (int(tile_rows_cap) // mult) * mult)
    tile_rows = min(rows_pad, cap)
    s_tiles = pl.cdiv(rows_pad, tile_rows)
    needs_mask = (rows_pad % tile_rows) != 0

    # Lane-dense views; no host-side broadcast of the labels over C.
    pred_r = pred.reshape(n, c, rows, 128)
    lab_r = label.reshape(n, rows, 128)
    lab1_r = label1.reshape(n, rows, 128)
    if rows_pad != rows:
        # Tiny zero-pad (< one sublane multiple) so tiling is layout-legal for any dtype.
        pad = rows_pad - rows
        pred_r = jnp.pad(pred_r, ((0, 0), (0, 0), (0, pad), (0, 0)))
        lab_r = jnp.pad(lab_r, ((0, 0), (0, pad), (0, 0)))
        lab1_r = jnp.pad(lab1_r, ((0, 0), (0, pad), (0, 0)))

    kernel = functools.partial(_multi_focal_kernel, tile_rows=tile_rows,
                               rows_valid=rows_pad, needs_mask=needs_mask)

    # Per-batch lane-dense partial sums; the batch axis is "parallel" (v7x megacore).
    stats = pl.pallas_call(
        kernel,
        out_shape=jax.ShapeDtypeStruct((n, NUM_STATS, 8, 128), jnp.float32),
        grid_spec=pltpu.PrefetchScalarGridSpec(
            num_scalar_prefetch=0,
            grid=(n, s_tiles, c),                 # C innermost -> label blocks reused across C
            in_specs=[
                pl.BlockSpec((None, None, tile_rows, 128),
                             lambda ni, si, ci: (ni, ci, si, 0)),
                pl.BlockSpec((None, tile_rows, 128),
                             lambda ni, si, ci: (ni, si, 0)),   # ignores ci -> reuse
                pl.BlockSpec((None, tile_rows, 128),
                             lambda ni, si, ci: (ni, si, 0)),   # ignores ci -> reuse
            ],
            out_specs=pl.BlockSpec((None, NUM_STATS, 8, 128),
                                   lambda ni, si, ci: (ni, 0, 0, 0)),
        ),
        compiler_params=pltpu.CompilerParams(
            dimension_semantics=("parallel", "arbitrary", "arbitrary"),
            vmem_limit_bytes=32 * 1024 * 1024,
        ),
    )(pred_r, lab_r, lab1_r)

    # Scalar epilogue in plain JAX (a handful of flops on (N, 9, 8, 128) partials).
    tot = jnp.sum(stats, axis=(0, 2, 3))          # (NUM_STATS,)
    inv_total = 1.0 / float(n * c * spatial)      # mean denominator (broadcast numel)
    fl0 = (tot[0] + tot[1]) * inv_total
    fl1 = (tot[0] + tot[2]) * inv_total
    total_focal = 0.5 * fl0 + 0.5 * fl1

    dice0 = (2.0 * tot[3] + DICE_EPS) / (tot[4] + tot[5] + DICE_EPS)
    dice1 = (2.0 * tot[6] + DICE_EPS) / (tot[7] + tot[8] + DICE_EPS)
    dice2 = jnp.clip(0.3 * dice0 + 0.7 * dice1, 0.0, 1.0)      # .clamp(0, 1)
    dice2 = jnp.where(dice2 < DICE_EPS, DICE_EPS, dice2)       # dice2[dice2 < 1e-8] = 1e-8

    return total_focal - 0.5 * jnp.log(dice2), fl0, fl1


def _reference(pred, label, label1):
    """Pure-JAX reference mirroring the PyTorch forward (for a sanity check)."""
    pred = pred.astype(jnp.float32)
    label = label.astype(jnp.float32)
    label1 = label1.astype(jnp.float32)

    def bfl(p, y):
        ly1 = -ALPHA * (1.0 - p) ** 2 * jnp.log(p + EPS) * y
        ly0 = -(1.0 - ALPHA) * p ** 2 * jnp.log(1.0 - p + EPS) * (1.0 - y)
        return jnp.mean(ly0 + ly1)

    fl0 = bfl(pred, label)
    fl1 = bfl(pred, label1)
    total_focal = 0.5 * fl0 + 0.5 * fl1
    p0 = pred[0, 0].reshape(-1); l0 = label[0, 0].reshape(-1)
    d0 = (2.0 * jnp.sum(p0 * l0) + DICE_EPS) / (jnp.sum(p0) + jnp.sum(l0) + DICE_EPS)
    p1 = pred[0, 1].reshape(-1); l1 = label1[0, 0].reshape(-1)
    d1 = (2.0 * jnp.sum(p1 * l1) + DICE_EPS) / (jnp.sum(p1) + jnp.sum(l1) + DICE_EPS)
    d2 = jnp.clip(0.3 * d0 + 0.7 * d1, 0.0, 1.0)
    d2 = jnp.where(d2 < DICE_EPS, DICE_EPS, d2)
    return total_focal - 0.5 * jnp.log(d2), fl0, fl1


if __name__ == "__main__":
    key = jax.random.PRNGKey(0)
    k1, k2, k3 = jax.random.split(key, 3)

    # Small 3D-UNet-style shapes: pred [N=2, C=2, D=8, H=16, W=16], labels single-channel.
    # Labels are fed as bf16 (exact for binary 0/1 values) to cut HBM bytes.
    pred = jax.nn.sigmoid(jax.random.normal(k1, (2, 2, 8, 16, 16), dtype=jnp.float32))
    label = jax.random.bernoulli(k2, 0.3, (2, 1, 8, 16, 16)).astype(jnp.bfloat16)
    label1 = jax.random.bernoulli(k3, 0.3, (2, 1, 8, 16, 16)).astype(jnp.bfloat16)

    loss, fl0, fl1 = multi_focal_loss(pred, label, label1)
    jax.block_until_ready((loss, fl0, fl1))

    ref_loss, ref_fl0, ref_fl1 = _reference(pred, label, label1)
    assert jnp.allclose(loss, ref_loss, rtol=2e-5, atol=1e-6), (loss, ref_loss)
    assert jnp.allclose(fl0, ref_fl0, rtol=2e-5, atol=1e-6), (fl0, ref_fl0)
    assert jnp.allclose(fl1, ref_fl1, rtol=2e-5, atol=1e-6), (fl1, ref_fl1)

    print("KERNEL_OK")
</pallas_src>

<mosaic_0001>
module attributes {stable_mosaic.version = 11 : i64} {
  func.func @_multi_focal_kernel(%arg0: i32, %arg1: i32, %arg2: i32, %arg3: memref<1x1x16x128xf32, #tpu.memory_space<vmem>>, %arg4: memref<1x16x128xbf16, #tpu.memory_space<vmem>>, %arg5: memref<1x16x128xbf16, #tpu.memory_space<vmem>>, %arg6: memref<1x9x8x128xf32, #tpu.memory_space<vmem>>) attributes {dimension_semantics = [#tpu.dimension_semantics<parallel>, #tpu.dimension_semantics<arbitrary>, #tpu.dimension_semantics<arbitrary>], iteration_bounds = array<i64: 2, 1, 2>, scalar_prefetch = 0 : i64, scratch_operands = 0 : i64, tpu.core_type = #tpu.core_type<tc>, window_params = [{transform_indices = @transform_0, window_bounds = array<i64: 1, 1, 16, 128>}, {transform_indices = @transform_1, window_bounds = array<i64: 1, 16, 128>}, {transform_indices = @transform_2, window_bounds = array<i64: 1, 16, 128>}, {transform_indices = @transform_3, window_bounds = array<i64: 1, 9, 8, 128>}]} {
    %c0_i32 = arith.constant 0 : i32
    %0 = arith.cmpi eq, %arg1, %c0_i32 : i32
    %c0_i32_0 = arith.constant 0 : i32
    %1 = arith.cmpi eq, %arg2, %c0_i32_0 : i32
    %2 = arith.andi %0, %1 : i1
    %3 = arith.extui %2 : i1 to i32
    %c0_i32_1 = arith.constant 0 : i32
    %4 = arith.cmpi ne, %3, %c0_i32_1 : i32
    scf.if %4 {
      %cst_45 = arith.constant 0.000000e+00 : f32
      %66 = vector.broadcast %cst_45 : f32 to vector<9x8x128xf32>
      %c0_46 = arith.constant 0 : index
      %c0_47 = arith.constant 0 : index
      %c0_48 = arith.constant 0 : index
      %c0_49 = arith.constant 0 : index
      %67 = vector.load %arg6[%c0_46, %c0_47, %c0_48, %c0_49] : memref<1x9x8x128xf32, #tpu.memory_space<vmem>>, vector<1x9x8x128xf32>
      %68 = vector.shape_cast %67 : vector<1x9x8x128xf32> to vector<9x8x128xf32>
      %69 = vector.shape_cast %66 : vector<9x8x128xf32> to vector<1x9x8x128xf32>
      tpu.vector_store %arg6[%c0_46, %c0_47, %c0_48, %c0_49], %69 {strides = array<i32>} : memref<1x9x8x128xf32, #tpu.memory_space<vmem>>, vector<1x9x8x128xf32>,
    } else {
    }
    %c0 = arith.constant 0 : index
    %c0_2 = arith.constant 0 : index
    %c0_3 = arith.constant 0 : index
    %c0_4 = arith.constant 0 : index
    %5 = vector.load %arg3[%c0, %c0_2, %c0_3, %c0_4] : memref<1x1x16x128xf32, #tpu.memory_space<vmem>>, vector<1x1x16x128xf32>
    %6 = vector.shape_cast %5 : vector<1x1x16x128xf32> to vector<16x128xf32>
    %c0_5 = arith.constant 0 : index
    %c0_6 = arith.constant 0 : index
    %c0_7 = arith.constant 0 : index
    %7 = vector.load %arg4[%c0_5, %c0_6, %c0_7] : memref<1x16x128xbf16, #tpu.memory_space<vmem>>, vector<1x16x128xbf16>
    %8 = vector.shape_cast %7 : vector<1x16x128xbf16> to vector<16x128xbf16>
    %9 = arith.extf %8 : vector<16x128xbf16> to vector<16x128xf32>
    %c0_8 = arith.constant 0 : index
    %c0_9 = arith.constant 0 : index
    %c0_10 = arith.constant 0 : index
    %10 = vector.load %arg5[%c0_8, %c0_9, %c0_10] : memref<1x16x128xbf16, #tpu.memory_space<vmem>>, vector<1x16x128xbf16>
    %11 = vector.shape_cast %10 : vector<1x16x128xbf16> to vector<16x128xbf16>
    %12 = arith.extf %11 : vector<16x128xbf16> to vector<16x128xf32>
    %cst = arith.constant 1.000000e+00 : f32
    %13 = vector.broadcast %cst : f32 to vector<16x128xf32>
    %14 = arith.subf %13, %6 : vector<16x128xf32>
    %15 = arith.mulf %14, %14 : vector<16x128xf32>
    %cst_11 = arith.constant -2.500000e-01 : f32
    %16 = vector.broadcast %cst_11 : f32 to vector<16x128xf32>
    %17 = arith.mulf %16, %15 : vector<16x128xf32>
    %cst_12 = arith.constant 1.000000e-07 : f32
    %18 = vector.broadcast %cst_12 : f32 to vector<16x128xf32>
    %19 = arith.addf %6, %18 : vector<16x128xf32>
    %20 = math.log %19 : vector<16x128xf32>
    %21 = arith.mulf %17, %20 : vector<16x128xf32>
    %22 = arith.mulf %6, %6 : vector<16x128xf32>
    %cst_13 = arith.constant -7.500000e-01 : f32
    %23 = vector.broadcast %cst_13 : f32 to vector<16x128xf32>
    %24 = arith.mulf %23, %22 : vector<16x128xf32>
    %cst_14 = arith.constant 1.000000e-07 : f32
    %25 = vector.broadcast %cst_14 : f32 to vector<16x128xf32>
    %26 = arith.addf %14, %25 : vector<16x128xf32>
    %27 = math.log %26 : vector<16x128xf32>
    %28 = arith.mulf %24, %27 : vector<16x128xf32>
    %29 = arith.subf %21, %28 : vector<16x128xf32>
    %c0_15 = arith.constant 0 : index
    %c0_16 = arith.constant 0 : index
    %c0_17 = arith.constant 0 : index
    %c0_18 = arith.constant 0 : index
    %30 = vector.load %arg6[%c0_15, %c0_16, %c0_17, %c0_18] : memref<1x9x8x128xf32, #tpu.memory_space<vmem>>, vector<1x1x8x128xf32>
    %31 = vector.shape_cast %30 : vector<1x1x8x128xf32> to vector<8x128xf32>
    %32 = vector.shape_cast %28 : vector<16x128xf32> to vector<2x8x128xf32>
    %cst_19 = arith.constant dense<0.000000e+00> : vector<8x128xf32>
    %33 = vector.multi_reduction <add>, %32, %cst_19 [0] : vector<2x8x128xf32> to vector<8x128xf32>
    %34 = arith.addf %31, %33 : vector<8x128xf32>
    %c0_20 = arith.constant 0 : index
    %c0_21 = arith.constant 0 : index
    %c0_22 = arith.constant 0 : index
    %c0_23 = arith.constant 0 : index
    %35 = vector.load %arg6[%c0_20, %c0_21, %c0_22, %c0_23] : memref<1x9x8x128xf32, #tpu.memory_space<vmem>>, vector<1x1x8x128xf32>
    %36 = vector.shape_cast %35 : vector<1x1x8x128xf32> to vector<8x128xf32>
    %37 = vector.shape_cast %34 : vector<8x128xf32> to vector<1x1x8x128xf32>
    tpu.vector_store %arg6[%c0_20, %c0_21, %c0_22, %c0_23], %37 {strides = array<i32>} : memref<1x9x8x128xf32, #tpu.memory_space<vmem>>, vector<1x1x8x128xf32>,
    %c0_24 = arith.constant 0 : index
    %c1 = arith.constant 1 : index
    %c0_25 = arith.constant 0 : index
    %c0_26 = arith.constant 0 : index
    %38 = vector.load %arg6[%c0_24, %c1, %c0_25, %c0_26] : memref<1x9x8x128xf32, #tpu.memory_space<vmem>>, vector<1x1x8x128xf32>
    %39 = vector.shape_cast %38 : vector<1x1x8x128xf32> to vector<8x128xf32>
    %40 = arith.mulf %29, %9 : vector<16x128xf32>
    %41 = vector.shape_cast %40 : vector<16x128xf32> to vector<2x8x128xf32>
    %cst_27 = arith.constant dense<0.000000e+00> : vector<8x128xf32>
    %42 = vector.multi_reduction <add>, %41, %cst_27 [0] : vector<2x8x128xf32> to vector<8x128xf32>
    %43 = arith.addf %39, %42 : vector<8x128xf32>
    %c0_28 = arith.constant 0 : index
    %c1_29 = arith.constant 1 : index
    %c0_30 = arith.constant 0 : index
    %c0_31 = arith.constant 0 : index
    %44 = vector.load %arg6[%c0_28, %c1_29, %c0_30, %c0_31] : memref<1x9x8x128xf32, #tpu.memory_space<vmem>>, vector<1x1x8x128xf32>
    %45 = vector.shape_cast %44 : vector<1x1x8x128xf32> to vector<8x128xf32>
    %46 = vector.shape_cast %43 : vector<8x128xf32> to vector<1x1x8x128xf32>
    tpu.vector_store %arg6[%c0_28, %c1_29, %c0_30, %c0_31], %46 {strides = array<i32>} : memref<1x9x8x128xf32, #tpu.memory_space<vmem>>, vector<1x1x8x128xf32>,
    %c0_32 = arith.constant 0 : index
    %c2 = arith.constant 2 : index
    %c0_33 = arith.constant 0 : index
    %c0_34 = arith.constant 0 : index
    %47 = vector.load %arg6[%c0_32, %c2, %c0_33, %c0_34] : memref<1x9x8x128xf32, #tpu.memory_space<vmem>>, vector<1x1x8x128xf32>
    %48 = vector.shape_cast %47 : vector<1x1x8x128xf32> to vector<8x128xf32>
    %49 = arith.mulf %29, %12 : vector<16x128xf32>
    %50 = vector.shape_cast %49 : vector<16x128xf32> to vector<2x8x128xf32>
    %cst_35 = arith.constant dense<0.000000e+00> : vector<8x128xf32>
    %51 = vector.multi_reduction <add>, %50, %cst_35 [0] : vector<2x8x128xf32> to vector<8x128xf32>
    %52 = arith.addf %48, %51 : vector<8x128xf32>
    %c0_36 = arith.constant 0 : index
    %c2_37 = arith.constant 2 : index
    %c0_38 = arith.constant 0 : index
    %c0_39 = arith.constant 0 : index
    %53 = vector.load %arg6[%c0_36, %c2_37, %c0_38, %c0_39] : memref<1x9x8x128xf32, #tpu.memory_space<vmem>>, vector<1x1x8x128xf32>
    %54 = vector.shape_cast %53 : vector<1x1x8x128xf32> to vector<8x128xf32>
    %55 = vector.shape_cast %52 : vector<8x128xf32> to vector<1x1x8x128xf32>
    tpu.vector_store %arg6[%c0_36, %c2_37, %c0_38, %c0_39], %55 {strides = array<i32>} : memref<1x9x8x128xf32, #tpu.memory_space<vmem>>, vector<1x1x8x128xf32>,
    %c0_i32_40 = arith.constant 0 : i32
    %56 = arith.cmpi eq, %arg0, %c0_i32_40 : i32
    %c0_i32_41 = arith.constant 0 : i32
    %57 = arith.cmpi eq, %arg2, %c0_i32_41 : i32
    %58 = arith.andi %56, %57 : i1
    %59 = arith.extui %58 : i1 to i32
    %c0_i32_42 = arith.constant 0 : i32
    %60 = arith.cmpi ne, %59, %c0_i32_42 : i32
    scf.if %60 {
      %c0_45 = arith.constant 0 : index
      %c3 = arith.constant 3 : index
      %c0_46 = arith.constant 0 : index
      %c0_47 = arith.constant 0 : index
      %66 = vector.load %arg6[%c0_45, %c3, %c0_46, %c0_47] : memref<1x9x8x128xf32, #tpu.memory_space<vmem>>, vector<1x1x8x128xf32>
      %67 = vector.shape_cast %66 : vector<1x1x8x128xf32> to vector<8x128xf32>
      %68 = arith.mulf %6, %9 : vector<16x128xf32>
      %69 = vector.shape_cast %68 : vector<16x128xf32> to vector<2x8x128xf32>
      %cst_48 = arith.constant dense<0.000000e+00> : vector<8x128xf32>
      %70 = vector.multi_reduction <add>, %69, %cst_48 [0] : vector<2x8x128xf32> to vector<8x128xf32>
      %71 = arith.addf %67, %70 : vector<8x128xf32>
      %c0_49 = arith.constant 0 : index
      %c3_50 = arith.constant 3 : index
      %c0_51 = arith.constant 0 : index
      %c0_52 = arith.constant 0 : index
      %72 = vector.load %arg6[%c0_49, %c3_50, %c0_51, %c0_52] : memref<1x9x8x128xf32, #tpu.memory_space<vmem>>, vector<1x1x8x128xf32>
      %73 = vector.shape_cast %72 : vector<1x1x8x128xf32> to vector<8x128xf32>
      %74 = vector.shape_cast %71 : vector<8x128xf32> to vector<1x1x8x128xf32>
      tpu.vector_store %arg6[%c0_49, %c3_50, %c0_51, %c0_52], %74 {strides = array<i32>} : memref<1x9x8x128xf32, #tpu.memory_space<vmem>>, vector<1x1x8x128xf32>,
      %c0_53 = arith.constant 0 : index
      %c4 = arith.constant 4 : index
      %c0_54 = arith.constant 0 : index
      %c0_55 = arith.constant 0 : index
      %75 = vector.load %arg6[%c0_53, %c4, %c0_54, %c0_55] : memref<1x9x8x128xf32, #tpu.memory_space<vmem>>, vector<1x1x8x128xf32>
      %76 = vector.shape_cast %75 : vector<1x1x8x128xf32> to vector<8x128xf32>
      %77 = vector.shape_cast %6 : vector<16x128xf32> to vector<2x8x128xf32>
      %cst_56 = arith.constant dense<0.000000e+00> : vector<8x128xf32>
      %78 = vector.multi_reduction <add>, %77, %cst_56 [0] : vector<2x8x128xf32> to vector<8x128xf32>
      %79 = arith.addf %76, %78 : vector<8x128xf32>
      %c0_57 = arith.constant 0 : index
      %c4_58 = arith.constant 4 : index
      %c0_59 = arith.constant 0 : index
      %c0_60 = arith.constant 0 : index
      %80 = vector.load %arg6[%c0_57, %c4_58, %c0_59, %c0_60] : memref<1x9x8x128xf32, #tpu.memory_space<vmem>>, vector<1x1x8x128xf32>
      %81 = vector.shape_cast %80 : vector<1x1x8x128xf32> to vector<8x128xf32>
      %82 = vector.shape_cast %79 : vector<8x128xf32> to vector<1x1x8x128xf32>
      tpu.vector_store %arg6[%c0_57, %c4_58, %c0_59, %c0_60], %82 {strides = array<i32>} : memref<1x9x8x128xf32, #tpu.memory_space<vmem>>, vector<1x1x8x128xf32>,
      %c0_61 = arith.constant 0 : index
      %c5 = arith.constant 5 : index
      %c0_62 = arith.constant 0 : index
      %c0_63 = arith.constant 0 : index
      %83 = vector.load %arg6[%c0_61, %c5, %c0_62, %c0_63] : memref<1x9x8x128xf32, #tpu.memory_space<vmem>>, vector<1x1x8x128xf32>
      %84 = vector.shape_cast %83 : vector<1x1x8x128xf32> to vector<8x128xf32>
      %85 = vector.shape_cast %9 : vector<16x128xf32> to vector<2x8x128xf32>
      %cst_64 = arith.constant dense<0.000000e+00> : vector<8x128xf32>
      %86 = vector.multi_reduction <add>, %85, %cst_64 [0] : vector<2x8x128xf32> to vector<8x128xf32>
      %87 = arith.addf %84, %86 : vector<8x128xf32>
      %c0_65 = arith.constant 0 : index
      %c5_66 = arith.constant 5 : index
      %c0_67 = arith.constant 0 : index
      %c0_68 = arith.constant 0 : index
      %88 = vector.load %arg6[%c0_65, %c5_66, %c0_67, %c0_68] : memref<1x9x8x128xf32, #tpu.memory_space<vmem>>, vector<1x1x8x128xf32>
      %89 = vector.shape_cast %88 : vector<1x1x8x128xf32> to vector<8x128xf32>
      %90 = vector.shape_cast %87 : vector<8x128xf32> to vector<1x1x8x128xf32>
      tpu.vector_store %arg6[%c0_65, %c5_66, %c0_67, %c0_68], %90 {strides = array<i32>} : memref<1x9x8x128xf32, #tpu.memory_space<vmem>>, vector<1x1x8x128xf32>,
    } else {
    }
    %c0_i32_43 = arith.constant 0 : i32
    %61 = arith.cmpi eq, %arg0, %c0_i32_43 : i32
    %c1_i32 = arith.constant 1 : i32
    %62 = arith.cmpi eq, %arg2, %c1_i32 : i32
    %63 = arith.andi %61, %62 : i1
    %64 = arith.extui %63 : i1 to i32
    %c0_i32_44 = arith.constant 0 : i32
    %65 = arith.cmpi ne, %64, %c0_i32_44 : i32
    scf.if %65 {
      %c0_45 = arith.constant 0 : index
      %c6 = arith.constant 6 : index
      %c0_46 = arith.constant 0 : index
      %c0_47 = arith.constant 0 : index
      %66 = vector.load %arg6[%c0_45, %c6, %c0_46, %c0_47] : memref<1x9x8x128xf32, #tpu.memory_space<vmem>>, vector<1x1x8x128xf32>
      %67 = vector.shape_cast %66 : vector<1x1x8x128xf32> to vector<8x128xf32>
      %68 = arith.mulf %6, %12 : vector<16x128xf32>
      %69 = vector.shape_cast %68 : vector<16x128xf32> to vector<2x8x128xf32>
      %cst_48 = arith.constant dense<0.000000e+00> : vector<8x128xf32>
      %70 = vector.multi_reduction <add>, %69, %cst_48 [0] : vector<2x8x128xf32> to vector<8x128xf32>
      %71 = arith.addf %67, %70 : vector<8x128xf32>
      %c0_49 = arith.constant 0 : index
      %c6_50 = arith.constant 6 : index
      %c0_51 = arith.constant 0 : index
      %c0_52 = arith.constant 0 : index
      %72 = vector.load %arg6[%c0_49, %c6_50, %c0_51, %c0_52] : memref<1x9x8x128xf32, #tpu.memory_space<vmem>>, vector<1x1x8x128xf32>
      %73 = vector.shape_cast %72 : vector<1x1x8x128xf32> to vector<8x128xf32>
      %74 = vector.shape_cast %71 : vector<8x128xf32> to vector<1x1x8x128xf32>
      tpu.vector_store %arg6[%c0_49, %c6_50, %c0_51, %c0_52], %74 {strides = array<i32>} : memref<1x9x8x128xf32, #tpu.memory_space<vmem>>, vector<1x1x8x128xf32>,
      %c0_53 = arith.constant 0 : index
      %c7 = arith.constant 7 : index
      %c0_54 = arith.constant 0 : index
      %c0_55 = arith.constant 0 : index
      %75 = vector.load %arg6[%c0_53, %c7, %c0_54, %c0_55] : memref<1x9x8x128xf32, #tpu.memory_space<vmem>>, vector<1x1x8x128xf32>
      %76 = vector.shape_cast %75 : vector<1x1x8x128xf32> to vector<8x128xf32>
      %77 = vector.shape_cast %6 : vector<16x128xf32> to vector<2x8x128xf32>
      %cst_56 = arith.constant dense<0.000000e+00> : vector<8x128xf32>
      %78 = vector.multi_reduction <add>, %77, %cst_56 [0] : vector<2x8x128xf32> to vector<8x128xf32>
      %79 = arith.addf %76, %78 : vector<8x128xf32>
      %c0_57 = arith.constant 0 : index
      %c7_58 = arith.constant 7 : index
      %c0_59 = arith.constant 0 : index
      %c0_60 = arith.constant 0 : index
      %80 = vector.load %arg6[%c0_57, %c7_58, %c0_59, %c0_60] : memref<1x9x8x128xf32, #tpu.memory_space<vmem>>, vector<1x1x8x128xf32>
      %81 = vector.shape_cast %80 : vector<1x1x8x128xf32> to vector<8x128xf32>
      %82 = vector.shape_cast %79 : vector<8x128xf32> to vector<1x1x8x128xf32>
      tpu.vector_store %arg6[%c0_57, %c7_58, %c0_59, %c0_60], %82 {strides = array<i32>} : memref<1x9x8x128xf32, #tpu.memory_space<vmem>>, vector<1x1x8x128xf32>,
      %c0_61 = arith.constant 0 : index
      %c8 = arith.constant 8 : index
      %c0_62 = arith.constant 0 : index
      %c0_63 = arith.constant 0 : index
      %83 = vector.load %arg6[%c0_61, %c8, %c0_62, %c0_63] : memref<1x9x8x128xf32, #tpu.memory_space<vmem>>, vector<1x1x8x128xf32>
      %84 = vector.shape_cast %83 : vector<1x1x8x128xf32> to vector<8x128xf32>
      %85 = vector.shape_cast %12 : vector<16x128xf32> to vector<2x8x128xf32>
      %cst_64 = arith.constant dense<0.000000e+00> : vector<8x128xf32>
      %86 = vector.multi_reduction <add>, %85, %cst_64 [0] : vector<2x8x128xf32> to vector<8x128xf32>
      %87 = arith.addf %84, %86 : vector<8x128xf32>
      %c0_65 = arith.constant 0 : index
      %c8_66 = arith.constant 8 : index
      %c0_67 = arith.constant 0 : index
      %c0_68 = arith.constant 0 : index
      %88 = vector.load %arg6[%c0_65, %c8_66, %c0_67, %c0_68] : memref<1x9x8x128xf32, #tpu.memory_space<vmem>>, vector<1x1x8x128xf32>
      %89 = vector.shape_cast %88 : vector<1x1x8x128xf32> to vector<8x128xf32>
      %90 = vector.shape_cast %87 : vector<8x128xf32> to vector<1x1x8x128xf32>
      tpu.vector_store %arg6[%c0_65, %c8_66, %c0_67, %c0_68], %90 {strides = array<i32>} : memref<1x9x8x128xf32, #tpu.memory_space<vmem>>, vector<1x1x8x128xf32>,
    } else {
    }
    return
  }
  func.func @transform_0(%arg0: i32, %arg1: i32, %arg2: i32) -> (i32, i32, i32, i32) {
    %c0_i32 = arith.constant 0 : i32
    %c0_i32_0 = arith.constant 0 : i32
    return %arg0, %arg2, %arg1, %c0_i32 : i32, i32, i32, i32
  }
  func.func @transform_1(%arg0: i32, %arg1: i32, %arg2: i32) -> (i32, i32, i32) {
    %c0_i32 = arith.constant 0 : i32
    %c0_i32_0 = arith.constant 0 : i32
    return %arg0, %arg1, %c0_i32 : i32, i32, i32
  }
  func.func @transform_2(%arg0: i32, %arg1: i32, %arg2: i32) -> (i32, i32, i32) {
    %c0_i32 = arith.constant 0 : i32
    %c0_i32_0 = arith.constant 0 : i32
    return %arg0, %arg1, %c0_i32 : i32, i32, i32
  }
  func.func @transform_3(%arg0: i32, %arg1: i32, %arg2: i32) -> (i32, i32, i32, i32) {
    %c0_i32 = arith.constant 0 : i32
    %c0_i32_0 = arith.constant 0 : i32
    %c0_i32_1 = arith.constant 0 : i32
    %c0_i32_2 = arith.constant 0 : i32
    return %arg0, %c0_i32, %c0_i32_0, %c0_i32_1 : i32, i32, i32, i32
  }
}

</mosaic_0001>

<llo_original>
// kernel: tpu_custom_call.1
$region0: #{tpu_custom_call.1}
  #allocation0 [shape = 'u32[]', space=smem, size = 0x4, offset = 0x4, fixed_abs, tag = 'smem constant byte address 0x4 - core index']
  #allocation1 [shape = 'u32[72,128]{1,0:T(1,128)}', space=vmem, size = 0x9000, scoped, tag = 'internal scratch']
  %s0 = inlined_call_operand.hbm [shape: f32[2,2,16,128], index: 0, kind: input, shape index: {}]
  %s1 = inlined_call_operand.hbm [shape: bf16[2,16,128], index: 1, kind: input, shape index: {}]
  %s2 = inlined_call_operand.hbm [shape: bf16[2,16,128], index: 2, kind: input, shape index: {}]
  %s3 = inlined_call_operand.hbm [shape: f32[2,9,8,128], index: 3, kind: output, shape index: {}]
  %s4 = sld [smem:[#allocation0]]
  $region69: #{tpu_custom_call.1} parent=0
    _
  %s6 = ssub.s32 1, %s4
  %s7 = scalar_select 0, %s6, %s4
  $region1: #{tpu_custom_call.1} parent=0
    #allocation2 [shape = 'u8[16384]{0}', space=vmem, size = 0x4000, scoped, tag = 'input window, operand 0']
    #allocation3 [shape = 's32[2]{0}', space=sflag, size = 0x8, scoped, tag = 'scoped memory for tpu_custom_call.1']
    #allocation4 [shape = 's32[2]{0}', space=sflag, size = 0x8, scoped, tag = 'scoped memory for tpu_custom_call.1']
    #allocation5 [shape = 'u8[8192]{0}', space=vmem, size = 0x2000, scoped, tag = 'input window, operand 1']
    #allocation6 [shape = 's32[2]{0}', space=sflag, size = 0x8, scoped, tag = 'scoped memory for tpu_custom_call.1']
    #allocation7 [shape = 'u8[8192]{0}', space=vmem, size = 0x2000, scoped, tag = 'input window, operand 2']
    #allocation8 [shape = 'u8[73728]{0}', space=vmem, size = 0x12000, scoped, tag = 'output window, operand 0']
    %8 = vsyncpa [#allocation3], 0
    %s9 = scalar_lea.sflag [#allocation3], 1
    %10 = vsyncpa %s9, 0
    %11 = vsyncpa [#allocation6], 0
    %s12 = scalar_lea.sflag [#allocation6], 1
    %13 = vsyncpa %s12, 0
    %14 = vsyncpa [#allocation4], 0
    %s15 = scalar_lea.sflag [#allocation4], 1
    %16 = vsyncpa %s15, 0
    loop: start=0, step=1, limit=6
    $region2: #{tpu_custom_call.1} parent=1 // loop_pre_header
      _
    $region3: #{tpu_custom_call.1} parent=1 // loop_header
      %s18 = sphi 0, %s22
      %p19 = scmp.ge.s32.totalorder %s18, 6
      %s25 = sphi 0, %s44
      %s26 = sphi 0, %s40
      %s27 = sphi 0, %s36
      %s28 = sphi 0, %s25
      %s29 = sphi 0, %s26
      %s30 = sphi 0, %s27
      %s31 = sphi 0, %s28
      %s32 = sphi 0, %s29
      %s33 = sphi 0, %s30
      %s51 = sphi 0, %s53
      %s54 = sphi 0, %s51
      %s55 = sphi 0, %s54
      %s71 = sphi 0, %s55
      %s79 = sphi 0, %s81
      %s82 = sphi 0, %s79
      %s83 = sphi 0, %s82
      %s99 = sphi 0, %s83
      %s107 = sphi 0, %s109
      %s110 = sphi 0, %s107
      %s111 = sphi 0, %s110
      %s127 = sphi 0, %s111
      %s133 = sphi 0, %s135
      %s136 = sphi 0, %s133
      %s137 = sphi 0, %s136
      %s153 = sphi 0, %s137
    $region4: #{tpu_custom_call.1} parent=1 // loop_header_branch
      %21 = sbr.rel (%p19) target = $region8
    $region5: #{tpu_custom_call.1} parent=1 // loop_body
      %s23 = ssub.s32 %s18, 1
      %s24 = ssub.s32 %s18, 2
      %s34 = sadd.s32 1, %s27
      %p35 = scmp.ge.s32.totalorder %s34, 2
      %s36 = scalar_select %p35, 0, %s34
      %s37 = sadd.s32 1, %s26
      %s38 = scalar_select %p35, %s37, %s26
      %p39 = scmp.ge.s32.totalorder %s38, 1
      %s40 = scalar_select %p39, 0, %s38
      %s41 = sadd.s32 1, %s25
      %s42 = scalar_select %p39, %s41, %s25
      %p43 = scmp.ge.s32.totalorder %s42, 2
      %s44 = scalar_select %p43, 0, %s42
      %s45 = ssub.s32 %s25, %s44
      %s46 = ssub.s32 %s27, %s36
      %s47 = sor.u32 %s45, %s46
      %s48 = ssub.s32 %s26, %s40
      %s49 = sor.u32 %s47, %s48
      %p50 = scmp.eq.s32.totalorder %s49, 0
      %s52 = sadd.s32 %s51, 1
      %s53 = scalar_select %p50, %s51, %s52
      %p56 = pneg %p50
      %p57 = scmp.eq.s32.totalorder %s18, 3
      %p58 = por %p56, %p57
      %p59 = scmp.ne.s32.totalorder %s51, %s54
      %p60 = scmp.eq.s32.totalorder %s18, 0
      %p61 = por %p59, %p60
      %p62 = scmp.ne.s32.totalorder %s51, %s54
      %p63 = scmp.eq.s32.totalorder %s23, 3
      %p64 = por %p62, %p63
      %p65 = scmp.ne.s32.totalorder %s54, %s55
      %p66 = scmp.eq.s32.totalorder %s23, 0
      %p67 = por %p65, %p66
      %p68 = scmp.ne.s32.totalorder %s54, %s55
      %p69 = scmp.eq.s32.totalorder %s24, 3
      %p70 = por %p68, %p69
      %p72 = scmp.ne.s32.totalorder %s55, %s71
      %p73 = scmp.eq.s32.totalorder %s24, 0
      %p74 = por %p72, %p73
      %s75 = ssub.s32 %s25, %s44
      %s76 = ssub.s32 %s26, %s40
      %s77 = sor.u32 %s75, %s76
      %p78 = scmp.eq.s32.totalorder %s77, 0
      %s80 = sadd.s32 %s79, 1
      %s81 = scalar_select %p78, %s79, %s80
      %p84 = pneg %p78
      %p85 = scmp.eq.s32.totalorder %s18, 3
      %p86 = por %p84, %p85
      %p87 = scmp.ne.s32.totalorder %s79, %s82
      %p88 = scmp.eq.s32.totalorder %s18, 0
      %p89 = por %p87, %p88
      %p90 = scmp.ne.s32.totalorder %s79, %s82
      %p91 = scmp.eq.s32.totalorder %s23, 3
      %p92 = por %p90, %p91
      %p93 = scmp.ne.s32.totalorder %s82, %s83
      %p94 = scmp.eq.s32.totalorder %s23, 0
      %p95 = por %p93, %p94
      %p96 = scmp.ne.s32.totalorder %s82, %s83
      %p97 = scmp.eq.s32.totalorder %s24, 3
      %p98 = por %p96, %p97
      %p100 = scmp.ne.s32.totalorder %s83, %s99
      %p101 = scmp.eq.s32.totalorder %s24, 0
      %p102 = por %p100, %p101
      %s103 = ssub.s32 %s25, %s44
      %s104 = ssub.s32 %s26, %s40
      %s105 = sor.u32 %s103, %s104
      %p106 = scmp.eq.s32.totalorder %s105, 0
      %s108 = sadd.s32 %s107, 1
      %s109 = scalar_select %p106, %s107, %s108
      %p112 = pneg %p106
      %p113 = scmp.eq.s32.totalorder %s18, 3
      %p114 = por %p112, %p113
      %p115 = scmp.ne.s32.totalorder %s107, %s110
      %p116 = scmp.eq.s32.totalorder %s18, 0
      %p117 = por %p115, %p116
      %p118 = scmp.ne.s32.totalorder %s107, %s110
      %p119 = scmp.eq.s32.totalorder %s23, 3
      %p120 = por %p118, %p119
      %p121 = scmp.ne.s32.totalorder %s110, %s111
      %p122 = scmp.eq.s32.totalorder %s23, 0
      %p123 = por %p121, %p122
      %p124 = scmp.ne.s32.totalorder %s110, %s111
      %p125 = scmp.eq.s32.totalorder %s24, 3
      %p126 = por %p124, %p125
      %p128 = scmp.ne.s32.totalorder %s111, %s127
      %p129 = scmp.eq.s32.totalorder %s24, 0
      %p130 = por %p128, %p129
      %s131 = ssub.s32 %s25, %s44
      %p132 = scmp.eq.s32.totalorder %s131, 0
      %s134 = sadd.s32 %s133, 1
      %s135 = scalar_select %p132, %s133, %s134
      %p138 = pneg %p132
      %p139 = scmp.eq.s32.totalorder %s18, 3
      %p140 = por %p138, %p139
      %p141 = scmp.ne.s32.totalorder %s133, %s136
      %p142 = scmp.eq.s32.totalorder %s18, 0
      %p143 = por %p141, %p142
      %p144 = scmp.ne.s32.totalorder %s133, %s136
      %p145 = scmp.eq.s32.totalorder %s23, 3
      %p146 = por %p144, %p145
      %p147 = scmp.ne.s32.totalorder %s136, %s137
      %p148 = scmp.eq.s32.totalorder %s23, 0
      %p149 = por %p147, %p148
      %p150 = scmp.ne.s32.totalorder %s136, %s137
      %p151 = scmp.eq.s32.totalorder %s24, 3
      %p152 = por %p150, %p151
      %p154 = scmp.ne.s32.totalorder %s137, %s153
      %p155 = scmp.eq.s32.totalorder %s24, 0
      %p156 = por %p154, %p155
      %p157 = scmp.le.s32.totalorder 1, %s18
      %p158 = scmp.lt.s32.totalorder %s18, 5
      %p159 = pnand %p157, %p158
      %p160 = pneg %p159
      // Predicated region
      $region9: #{tpu_custom_call.1} parent=5 // pred_check
        _
      $region10: #{tpu_custom_call.1} parent=5 // pred_check_branch
        %162 = sbr.rel (%p159) target = $region12
      $region11: #{tpu_custom_call.1} parent=5 // pred_region
        %s163 = ssub.s32 %s18, 1
      $region12: #{tpu_custom_call.1} parent=5 // pred_fallthru
        _
      %p164 = scmp.lt.s32.totalorder %s18, 4
      // Predicated region
      $region13: #{tpu_custom_call.1} parent=5 // pred_check
        %p165 = pneg %p164
      $region14: #{tpu_custom_call.1} parent=5 // pred_check_branch
        %167 = sbr.rel (%p165) target = $region16
      $region15: #{tpu_custom_call.1} parent=5 // pred_region
        // Predicated region
        $region17: #{tpu_custom_call.1} parent=15 // pred_check
          %p168 = pneg %p61
        $region18: #{tpu_custom_call.1} parent=15 // pred_check_branch
          %170 = sbr.rel (%p168) target = $region20
        $region19: #{tpu_custom_call.1} parent=15 // pred_region
          %s171 = sand.u32 %s51, 1
          %s172 = scalar_lea.sflag [#allocation3], %s171
          %s173 = sand.u32 %s51, 1
          %s174 = smul.addr %s173, 16
          %s175 = scalar_lea.vmem [#allocation2], %s174
          %s176 = smul.u32 2, %s26
          %178 = vsyncadd %s172, 0
          %s179 = smul.addr %s27, 2
          %s180 = sadd.s32 %s176, %s179
          %s181 = smul.addr %s25, 4
          %s182 = sadd.s32 %s180, %s181
          %s183 = smul.addr %s182, 8
          %s184 = scalar_lea.hbm %s0, %s183
          %s185 = sshll.u32 %s184, 4
          %s186 = int_to_ptr.hbm [resolvable:$true] %s185
          %s187 = sshll.u32 %s175, 4
          %s188 = int_to_ptr.vmem [resolvable:$true] %s187
          %193 = dma.hbm_to_vmem [thread:$0]  %s186, 256, %s188, %s172, 128, 128, 8
        $region20: #{tpu_custom_call.1} parent=15 // pred_fallthru
          _
        // Predicated region
        $region21: #{tpu_custom_call.1} parent=15 // pred_check
          %p194 = pneg %p89
        $region22: #{tpu_custom_call.1} parent=15 // pred_check_branch
          %196 = sbr.rel (%p194) target = $region24
        $region23: #{tpu_custom_call.1} parent=15 // pred_region
          %s197 = sand.u32 %s18, 1
          %s198 = scalar_lea.sflag [#allocation6], %s197
          %s199 = sand.u32 %s79, 1
          %s200 = smul.addr %s199, 8
          %s201 = scalar_lea.vmem [#allocation5], %s200
          %s202 = smul.u32 2, %s26
          %204 = vsyncadd %s198, 0
          %s205 = smul.addr %s25, 2
          %s206 = sadd.s32 %s202, %s205
          %s207 = smul.addr %s206, 4
          %s208 = scalar_lea.hbm %s1, %s207
          %s209 = sshll.u32 %s208, 4
          %s210 = int_to_ptr.hbm [resolvable:$true] %s209
          %s211 = sshll.u32 %s201, 4
          %s212 = int_to_ptr.vmem [resolvable:$true] %s211
          %217 = dma.hbm_to_vmem [thread:$0]  %s210, 128, %s212, %s198, 64, 64, 4
        $region24: #{tpu_custom_call.1} parent=15 // pred_fallthru
          _
        // Predicated region
        $region25: #{tpu_custom_call.1} parent=15 // pred_check
          %p218 = pneg %p117
        $region26: #{tpu_custom_call.1} parent=15 // pred_check_branch
          %220 = sbr.rel (%p218) target = $region28
        $region27: #{tpu_custom_call.1} parent=15 // pred_region
          %s221 = sand.u32 %s18, 1
          %s222 = scalar_lea.sflag [#allocation6], %s221
          %s223 = sand.u32 %s107, 1
          %s224 = smul.addr %s223, 8
          %s225 = scalar_lea.vmem [#allocation7], %s224
          %s226 = smul.u32 2, %s26
          %228 = vsyncadd %s222, 0
          %s229 = smul.addr %s25, 2
          %s230 = sadd.s32 %s226, %s229
          %s231 = smul.addr %s230, 4
          %s232 = scalar_lea.hbm %s2, %s231
          %s233 = sshll.u32 %s232, 4
          %s234 = int_to_ptr.hbm [resolvable:$true] %s233
          %s235 = sshll.u32 %s225, 4
          %s236 = int_to_ptr.vmem [resolvable:$true] %s235
          %241 = dma.hbm_to_vmem [thread:$0]  %s234, 128, %s236, %s222, 64, 64, 4
        $region28: #{tpu_custom_call.1} parent=15 // pred_fallthru
          _
      $region16: #{tpu_custom_call.1} parent=5 // pred_fallthru
        _
      %p242 = scmp.le.s32.totalorder 1, %s18
      %p243 = scmp.lt.s32.totalorder %s18, 5
      %p244 = pnand %p242, %p243
      %p245 = pneg %p244
      // Predicated region
      $region29: #{tpu_custom_call.1} parent=5 // pred_check
        _
      $region30: #{tpu_custom_call.1} parent=5 // pred_check_branch
        %247 = sbr.rel (%p244) target = $region32
      $region31: #{tpu_custom_call.1} parent=5 // pred_region
        %s248 = ssub.s32 %s18, 1
        %s249 = sand.u32 %s54, 1
        %s250 = scalar_lea.sflag [#allocation3], %s249
        %s251 = sand.u32 %s54, 1
        %s252 = smul.addr %s251, 16
        %s253 = scalar_lea.vmem [#allocation2], %s252
        // Predicated region
        $region33: #{tpu_custom_call.1} parent=31 // pred_check
          %p254 = pneg %p67
        $region34: #{tpu_custom_call.1} parent=31 // pred_check_branch
          %256 = sbr.rel (%p254) target = $region36
        $region35: #{tpu_custom_call.1} parent=31 // pred_region
          %258 = dma.done %s250, 256
        $region36: #{tpu_custom_call.1} parent=31 // pred_fallthru
          _
        %s259 = sand.u32 %s23, 1
        %s260 = scalar_lea.sflag [#allocation6], %s259
        %s261 = sand.u32 %s82, 1
        %s262 = smul.addr %s261, 8
        %s263 = scalar_lea.vmem [#allocation5], %s262
        // Predicated region
        $region37: #{tpu_custom_call.1} parent=31 // pred_check
          %p264 = pneg %p95
        $region38: #{tpu_custom_call.1} parent=31 // pred_check_branch
          %266 = sbr.rel (%p264) target = $region40
        $region39: #{tpu_custom_call.1} parent=31 // pred_region
          %268 = dma.done %s260, 128
        $region40: #{tpu_custom_call.1} parent=31 // pred_fallthru
          _
        %s269 = sand.u32 %s23, 1
        %s270 = scalar_lea.sflag [#allocation6], %s269
        %s271 = sand.u32 %s110, 1
        %s272 = smul.addr %s271, 8
        %s273 = scalar_lea.vmem [#allocation7], %s272
        // Predicated region
        $region41: #{tpu_custom_call.1} parent=31 // pred_check
          %p274 = pneg %p123
        $region42: #{tpu_custom_call.1} parent=31 // pred_check_branch
          %276 = sbr.rel (%p274) target = $region44
        $region43: #{tpu_custom_call.1} parent=31 // pred_region
          %278 = dma.done %s270, 128
        $region44: #{tpu_custom_call.1} parent=31 // pred_fallthru
          _
        %s279 = sand.u32 %s54, 1
        %s280 = scalar_lea.sflag [#allocation3], %s279
        %s281 = sand.u32 %s54, 1
        %s282 = smul.addr %s281, 16
        %s283 = scalar_lea.vmem [#allocation2], %s282
        %p284 = pneg %p67
        %p285 = pneg %p64
        %s286 = sand.u32 %s23, 1
        %s287 = scalar_lea.sflag [#allocation6], %s286
        %s288 = sand.u32 %s82, 1
        %s289 = smul.addr %s288, 8
        %s290 = scalar_lea.vmem [#allocation5], %s289
        %p291 = pneg %p95
        %p292 = pneg %p92
        %s293 = sand.u32 %s23, 1
        %s294 = scalar_lea.sflag [#allocation6], %s293
        %s295 = sand.u32 %s110, 1
        %s296 = smul.addr %s295, 8
        %s297 = scalar_lea.vmem [#allocation7], %s296
        %p298 = pneg %p123
        %p299 = pneg %p120
        %p300 = pneg %p149
        %p301 = pneg %p146
        %s302 = sand.u32 %s136, 1
        %s303 = scalar_lea.sflag [#allocation4], %s302
        %s304 = sand.u32 %s136, 1
        %s305 = smul.addr %s304, 72
        %s306 = scalar_lea.vmem [#allocation8], %s305
        %s307 = smul.u32 2, %s29
        %s308 = smul.u32 2, %s29
        %s309 = smul.u32 2, %s29
        %p310 = scmp.eq.s32.totalorder %s29, 0
        %p311 = scmp.eq.s32.totalorder %s30, 0
        %p312 = pnand %p310, %p311
        %p313 = pneg %p312
        // Predicated region
        $region45: #{tpu_custom_call.1} parent=31 // pred_check
          _
        $region46: #{tpu_custom_call.1} parent=31 // pred_check_branch
          %315 = sbr.rel (%p312) target = $region48
        $region47: #{tpu_custom_call.1} parent=31 // pred_region
          %316 = vst [vmem:[%s306] sm:$0xff] 0.0
          %317 = vst [vmem:[%s306 + $0x8] sm:$0xff] 0.0
          %318 = vst [vmem:[%s306 + $0x10] sm:$0xff] 0.0
          %319 = vst [vmem:[%s306 + $0x18] sm:$0xff] 0.0
          %320 = vst [vmem:[%s306 + $0x20] sm:$0xff] 0.0
          %321 = vst [vmem:[%s306 + $0x28] sm:$0xff] 0.0
          %322 = vst [vmem:[%s306 + $0x30] sm:$0xff] 0.0
          %323 = vst [vmem:[%s306 + $0x38] sm:$0xff] 0.0
          %324 = vst [vmem:[%s306 + $0x40] sm:$0xff] 0.0
        $region48: #{tpu_custom_call.1} parent=31 // pred_fallthru
          _
        %v325 = vld [vmem:[%s253] sm:$0xff]
        %v326 = vld [vmem:[%s253 + $0x8] sm:$0xff]
        %v327 = vld [vmem:[%s263] sm:$0xf]
        %v328 = vld [vmem:[%s263 + $0x4] sm:$0xf]
        %v329 = vunpack.c.l.bf16 %v327
        %v330 = vunpack.c.l.bf16 %v328
        %v331 = vld [vmem:[%s273] sm:$0xf]
        %v332 = vld [vmem:[%s273 + $0x4] sm:$0xf]
        %v333 = vunpack.c.l.bf16 %v331
        %v334 = vunpack.c.l.bf16 %v332
        %v335 = vsub.f32 1.0, %v325
        %v336 = vsub.f32 1.0, %v326
        %v337 = vmul.f32 %v335, %v335
        %v338 = vmul.f32 %v336, %v336
        %v339 = vmul.f32 %v337, -0.25
        %v340 = vmul.f32 %v338, -0.25
        %v341 = vadd.f32 %v325, 1e-07
        %v342 = vadd.f32 %v326, 1e-07
        %v343 = vlog2.pop %v341
        %v344 = vmul.f32 %v343, 0.6931472
        %v345 = vlog2.pop %v342
        %v346 = vmul.f32 %v345, 0.6931472
        %v347 = vmul.f32 %v339, %v344
        %v348 = vmul.f32 %v340, %v346
        %v349 = vmul.f32 %v325, %v325
        %v350 = vmul.f32 %v326, %v326
        %v351 = vmul.f32 %v349, -0.75
        %v352 = vmul.f32 %v350, -0.75
        %v353 = vadd.f32 %v335, 1e-07
        %v354 = vadd.f32 %v336, 1e-07
        %v355 = vlog2.pop %v353
        %v356 = vmul.f32 %v355, 0.6931472
        %v357 = vlog2.pop %v354
        %v358 = vmul.f32 %v357, 0.6931472
        %v359 = vmul.f32 %v351, %v356
        %v360 = vmul.f32 %v352, %v358
        %v361 = vsub.f32 %v347, %v359
        %v362 = vsub.f32 %v348, %v360
        %v363 = vld [vmem:[%s306] sm:$0xff]
        %v364 = vadd.f32 %v359, %v360
        %v365 = vadd.f32 %v363, %v364
        %366 = vst [vmem:[%s306] sm:$0xff] %v365
        %s367 = scalar_lea.vmem %s306, 8 [#allocation8]
        %v368 = vld [vmem:[%s367] sm:$0xff]
        %v369 = vmul.f32 %v361, %v329
        %v370 = vmul.f32 %v362, %v330
        %v371 = vadd.f32 %v369, %v370
        %v372 = vadd.f32 %v368, %v371
        %373 = vst [vmem:[%s367] sm:$0xff] %v372
        %s374 = scalar_lea.vmem %s306, 16 [#allocation8]
        %v375 = vld [vmem:[%s374] sm:$0xff]
        %v376 = vmul.f32 %v361, %v333
        %v377 = vmul.f32 %v362, %v334
        %v378 = vadd.f32 %v376, %v377
        %v379 = vadd.f32 %v375, %v378
        %380 = vst [vmem:[%s374] sm:$0xff] %v379
        %p381 = scmp.eq.s32.totalorder %s28, 0
        %p382 = pnand %p381, %p311
        %p383 = pneg %p382
        // Predicated region
        $region49: #{tpu_custom_call.1} parent=31 // pred_check
          _
        $region50: #{tpu_custom_call.1} parent=31 // pred_check_branch
          %385 = sbr.rel (%p382) target = $region52
        $region51: #{tpu_custom_call.1} parent=31 // pred_region
          %s386 = scalar_lea.vmem %s306, 24 [#allocation8]
          %v387 = vld [vmem:[%s386] sm:$0xff]
          %v388 = vmul.f32 %v325, %v329
          %v389 = vmul.f32 %v326, %v330
          %v390 = vadd.f32 %v388, %v389
          %v391 = vadd.f32 %v387, %v390
          %392 = vst [vmem:[%s386] sm:$0xff] %v391
          %s393 = scalar_lea.vmem %s306, 32 [#allocation8]
          %v394 = vld [vmem:[%s393] sm:$0xff]
          %v395 = vadd.f32 %v325, %v326
          %v396 = vadd.f32 %v394, %v395
          %397 = vst [vmem:[%s393] sm:$0xff] %v396
          %s398 = scalar_lea.vmem %s306, 40 [#allocation8]
          %v399 = vld [vmem:[%s398] sm:$0xff]
          %v400 = vadd.f32 %v329, %v330
          %v401 = vadd.f32 %v399, %v400
          %402 = vst [vmem:[%s398] sm:$0xff] %v401
        $region52: #{tpu_custom_call.1} parent=31 // pred_fallthru
          _
        %p403 = scmp.eq.s32.totalorder %s30, 1
        %p404 = pnand %p381, %p403
        %p405 = pneg %p404
        // Predicated region
        $region53: #{tpu_custom_call.1} parent=31 // pred_check
          _
        $region54: #{tpu_custom_call.1} parent=31 // pred_check_branch
          %407 = sbr.rel (%p404) target = $region56
        $region55: #{tpu_custom_call.1} parent=31 // pred_region
          %s408 = scalar_lea.vmem %s306, 48 [#allocation8]
          %v409 = vld [vmem:[%s408] sm:$0xff]
          %v410 = vmul.f32 %v325, %v333
          %v411 = vmul.f32 %v326, %v334
          %v412 = vadd.f32 %v410, %v411
          %v413 = vadd.f32 %v409, %v412
          %414 = vst [vmem:[%s408] sm:$0xff] %v413
          %s415 = scalar_lea.vmem %s306, 56 [#allocation8]
          %v416 = vld [vmem:[%s415] sm:$0xff]
          %v417 = vadd.f32 %v325, %v326
          %v418 = vadd.f32 %v416, %v417
          %419 = vst [vmem:[%s415] sm:$0xff] %v418
          %s420 = scalar_lea.vmem %s306, 64 [#allocation8]
          %v421 = vld [vmem:[%s420] sm:$0xff]
          %v422 = vadd.f32 %v333, %v334
          %v423 = vadd.f32 %v421, %v422
          %424 = vst [vmem:[%s420] sm:$0xff] %v423
        $region56: #{tpu_custom_call.1} parent=31 // pred_fallthru
          _
        %s425 = sand.u32 %s136, 1
        %s426 = scalar_lea.sflag [#allocation4], %s425
        %s427 = sand.u32 %s136, 1
        %s428 = smul.addr %s427, 72
        %s429 = scalar_lea.vmem [#allocation8], %s428
        // Predicated region
        $region57: #{tpu_custom_call.1} parent=31 // pred_check
          %p430 = pneg %p146
        $region58: #{tpu_custom_call.1} parent=31 // pred_check_branch
          %432 = sbr.rel (%p430) target = $region60
        $region59: #{tpu_custom_call.1} parent=31 // pred_region
          %434 = vsyncadd %s426, 0
          %s435 = smul.addr %s28, 9
          %s436 = smul.addr %s435, 8
          %s437 = scalar_lea.hbm %s3, %s436
          %s438 = sshll.u32 %s429, 4
          %s439 = int_to_ptr.vmem [resolvable:$true] %s438
          %s440 = sshll.u32 %s437, 4
          %s441 = int_to_ptr.hbm [resolvable:$true] %s440
          %446 = dma.vmem_to_hbm [thread:$0]  %s439, 1152, %s441, %s426, 128, 128, 8
        $region60: #{tpu_custom_call.1} parent=31 // pred_fallthru
          _
      $region32: #{tpu_custom_call.1} parent=5 // pred_fallthru
        _
      %p447 = scmp.le.s32.totalorder 2, %s18
      // Predicated region
      $region61: #{tpu_custom_call.1} parent=5 // pred_check
        %p448 = pneg %p447
      $region62: #{tpu_custom_call.1} parent=5 // pred_check_branch
        %450 = sbr.rel (%p448) target = $region64
      $region63: #{tpu_custom_call.1} parent=5 // pred_region
        %s451 = ssub.s32 %s18, 2
        // Predicated region
        $region65: #{tpu_custom_call.1} parent=63 // pred_check
          %p452 = pneg %p152
        $region66: #{tpu_custom_call.1} parent=63 // pred_check_branch
          %454 = sbr.rel (%p452) target = $region68
        $region67: #{tpu_custom_call.1} parent=63 // pred_region
          %s455 = sand.u32 %s137, 1
          %s456 = scalar_lea.sflag [#allocation4], %s455
          %s457 = sand.u32 %s137, 1
          %s458 = smul.addr %s457, 72
          %s459 = scalar_lea.vmem [#allocation8], %s458
          %461 = dma.done %s456, 1152
        $region68: #{tpu_custom_call.1} parent=63 // pred_fallthru
          _
      $region64: #{tpu_custom_call.1} parent=5 // pred_fallthru
        _
    $region6: #{tpu_custom_call.1} parent=1 // loop_footer
      %s22 = sadd.s32 1, %s18
    $region7: #{tpu_custom_call.1} parent=1 // loop_footer_branch
      %17 = sbr.rel target = $region3
    $region8: #{tpu_custom_call.1} parent=1 // loop_exit
      _
    %462 = vsyncpa [#allocation3], 1
    %s463 = scalar_lea.sflag [#allocation3], 1
    %464 = vsyncpa %s463, 1
    %465 = vsyncpa [#allocation6], 1
    %s466 = scalar_lea.sflag [#allocation6], 1
    %467 = vsyncpa %s466, 1
    %468 = vsyncpa [#allocation4], 1
    %s469 = scalar_lea.sflag [#allocation4], 1
    %470 = vsyncpa %s469, 1

</llo_original>
